<compile_context>
chip_gen: v6e
topology: v6e:2x2x1
jax: 0.10.0
libtpu: 0.0.40
codegen_flags: <defaults>
</compile_context>

<pallas_src>
import functools

import jax
import jax.numpy as jnp
from jax.experimental import pallas as pl
from jax.experimental.pallas import tpu as pltpu


def _rmsnorm_kernel(x_ref, w_ref, o_ref, *, eps):
    # Match PyTorch semantics: compute in float32, cast back, then * weight.
    # (If a bundle dump ever shows the VALU slot binding on v5e bf16, switch
    # to an f32 weight multiply with a single final downcast.)
    x = x_ref[...].astype(jnp.float32)                    # (tile_rows, D)
    norm = jnp.mean(x * x, axis=-1, keepdims=True)        # (tile_rows, 1)
    xnorm = x * jax.lax.rsqrt(norm + eps)                 # f32
    o_ref[...] = xnorm.astype(o_ref.dtype) * w_ref[...]   # cast, then * weight


def _tpu_generation_info():
    """Returns (vmem_capacity_bytes, tensorcores_per_chip)."""
    kind = ""
    try:
        kind = jax.devices()[0].device_kind.lower()
    except Exception:
        pass
    is_v7 = "v7" in kind
    num_cores = 2 if is_v7 else 1

    vmem_cap = None
    try:
        info = pltpu.get_tpu_info()
        cap = getattr(info, "vmem_capacity_bytes", None)
        if cap:
            vmem_cap = int(cap)
    except Exception:
        pass
    if vmem_cap is None:
        # Device-kind-keyed fallback: v7x has 64 MiB VMEM/core, v5e/v6e 128 MiB.
        vmem_cap = (64 << 20) if is_v7 else (128 << 20)
    return vmem_cap, num_cores


def _pick_tile_rows(n_rows, d, itemsize, vmem_cap, num_cores):
    """Byte-targeted row tile, aligned to sublane packing, with >=4(8) blocks."""
    # Sublane packing of the activation dtype: 8 (f32), 16 (bf16), 32 (int8).
    pack = max(8, 32 // max(int(itemsize), 1))

    # ~4 MiB per x block on 64 MiB-VMEM parts (v7x, deeper buffering), ~8 MiB
    # elsewhere.  Per-step overhead is amortized above ~2 MiB; no row cap.
    target_bytes = (4 << 20) if vmem_cap <= (64 << 20) else (8 << 20)
    tile = max(pack, (target_bytes // max(d * itemsize, 1)) // pack * pack)

    # Guarantee enough grid steps for double-buffering to overlap input fetch
    # of i+1 / writeback of i-1 with compute of i: >= 4 blocks (>= 8 on v7x).
    min_blocks = 4 * num_cores
    rows_per_block_cap = -(-n_rows // min_blocks)  # cdiv
    if rows_per_block_cap >= pack:
        tile = min(tile, (rows_per_block_cap // pack) * pack)

    # Never exceed the (pack-rounded) total row count.
    tile = min(tile, max(pack, (-(-n_rows // pack)) * pack))

    # On 2-TensorCore chips keep the block count even so the grid load-balances
    # across cores; shrink the tile slightly if needed.
    if num_cores == 2:
        blocks = -(-n_rows // tile)
        if blocks > 1 and blocks % 2 == 1:
            t = tile
            while t > pack:
                t -= pack
                if (-(-n_rows // t)) % 2 == 0:
                    tile = t
                    break
    return tile


def _vmem_limit_bytes(tile_rows, d, itemsize, vmem_cap, in_buffers):
    """Dtype-aware scoped-VMEM request with headroom for Mosaic scratch."""
    x_block = tile_rows * d * itemsize          # one x (or out) block in x.dtype
    f32_tmp = 2 * tile_rows * d * 4             # x.astype(f32) + x*x / xnorm temps
    needed = (in_buffers + 2) * x_block + f32_tmp + (2 << 20)  # +double-buffered out +slack
    cap_frac = 0.75 if vmem_cap <= (64 << 20) else 0.9
    return min(int(vmem_cap * cap_frac), max(32 << 20, needed))


def _x_block_spec(tile_rows, d, deep_buffer):
    if deep_buffer:
        try:
            return pl.BlockSpec((tile_rows, d), lambda i: (i, 0),
                                pipeline_mode=pl.Buffered(3))
        except TypeError:
            pass  # pipeline_mode unavailable in this jax version; default depth.
    return pl.BlockSpec((tile_rows, d), lambda i: (i, 0))


def rmsnorm(x, weight, eps=1e-6, *, tile_rows=None):
    """RMSNorm over the last dim of x. weight has shape (hidden,)."""
    orig_shape = x.shape
    D = orig_shape[-1]
    x2d = x.reshape(-1, D)
    N = x2d.shape[0]
    itemsize = jnp.dtype(x.dtype).itemsize

    vmem_cap, num_cores = _tpu_generation_info()
    if tile_rows is None:
        tile_rows = _pick_tile_rows(N, D, itemsize, vmem_cap, num_cores)

    w2d = weight.reshape(1, D).astype(x.dtype)

    # No HBM-side padding: the partial trailing block is handled by Pallas
    # (OOB output rows are masked; the reduction is strictly per-row so valid
    # rows never see garbage from the padded input region).
    grid = (pl.cdiv(N, tile_rows),)

    # v7x (64 MiB VMEM, 3.2 TB/s HBM): smaller blocks + 3-deep input buffering
    # hides per-step DMA latency better than one near-VMEM-filling tile.
    deep_buffer = (num_cores == 2)
    in_buffers = 3 if deep_buffer else 2
    x_spec = _x_block_spec(tile_rows, D, deep_buffer)

    vmem_limit = _vmem_limit_bytes(tile_rows, D, itemsize, vmem_cap, in_buffers)

    out = pl.pallas_call(
        functools.partial(_rmsnorm_kernel, eps=eps),
        out_shape=jax.ShapeDtypeStruct((N, D), x.dtype),
        grid_spec=pltpu.PrefetchScalarGridSpec(
            num_scalar_prefetch=0,
            grid=grid,
            in_specs=[
                x_spec,
                pl.BlockSpec((1, D), lambda i: (0, 0)),  # weight: tiny vs. x stream
            ],
            out_specs=pl.BlockSpec((tile_rows, D), lambda i: (i, 0)),
        ),
        compiler_params=pltpu.CompilerParams(
            dimension_semantics=("parallel",),
            vmem_limit_bytes=vmem_limit,
        ),
    )(x2d, w2d)

    return out.reshape(orig_shape)


def rmsnorm_ref(x, weight, eps=1e-6):
    dtype = x.dtype
    xf = x.astype(jnp.float32)
    norm = jnp.mean(xf * xf, axis=-1, keepdims=True)
    xnorm = (xf * jax.lax.rsqrt(norm + eps)).astype(dtype)
    return xnorm * weight.astype(dtype)


if __name__ == "__main__":
    key = jax.random.PRNGKey(0)

    # Small GPT-like shapes: batch=2, seq=8, hidden=128 (lane-dense last dim).
    batch, seq, hidden = 2, 8, 128
    x = jax.random.normal(key, (batch, seq, hidden), dtype=jnp.float32)
    # Deterministic parameter init matching torch.ones(embdim).
    weight = jnp.ones((hidden,), dtype=jnp.float32)

    out = jax.block_until_ready(rmsnorm(x, weight, eps=1e-6))
    ref = rmsnorm_ref(x, weight, eps=1e-6)
    assert out.shape == x.shape and out.dtype == x.dtype
    assert jnp.allclose(out, ref, atol=1e-5, rtol=1e-5), "f32 mismatch vs reference"

    # Exercise the un-padded / masked-tail path (rows not a multiple of the
    # tile) and the typical GPT bf16 activation dtype.
    x2 = jax.random.normal(jax.random.PRNGKey(1), (3, 5, hidden), dtype=jnp.bfloat16)
    w2 = 1.0 + 0.01 * jnp.arange(hidden, dtype=jnp.float32)
    out2 = jax.block_until_ready(rmsnorm(x2, w2, eps=1e-6))
    ref2 = rmsnorm_ref(x2, w2, eps=1e-6)
    assert out2.shape == x2.shape and out2.dtype == x2.dtype
    assert jnp.allclose(out2.astype(jnp.float32), ref2.astype(jnp.float32),
                        atol=2e-2, rtol=2e-2), "bf16 mismatch vs reference"

    print("KERNEL_OK")
</pallas_src>

<mosaic_0001>
module attributes {stable_mosaic.version = 11 : i64} {
  func.func @_rmsnorm_kernel(%arg0: i32, %arg1: memref<16x128xf32, #tpu.memory_space<vmem>>, %arg2: memref<1x128xf32, #tpu.memory_space<vmem>>, %arg3: memref<16x128xf32, #tpu.memory_space<vmem>>) attributes {dimension_semantics = [#tpu.dimension_semantics<parallel>], iteration_bounds = array<i64: 1>, scalar_prefetch = 0 : i64, scratch_operands = 0 : i64, tpu.core_type = #tpu.core_type<tc>, window_params = [{transform_indices = @transform_0, window_bounds = array<i64: 16, 128>}, {pipeline_mode = #tpu.pipeline_mode<synchronous>, transform_indices = @transform_1, window_bounds = array<i64: 1, 128>}, {transform_indices = @transform_2, window_bounds = array<i64: 16, 128>}]} {
    %c0 = arith.constant 0 : index
    %c0_0 = arith.constant 0 : index
    %0 = vector.load %arg1[%c0, %c0_0] : memref<16x128xf32, #tpu.memory_space<vmem>>, vector<16x128xf32>
    %1 = arith.mulf %0, %0 : vector<16x128xf32>
    %cst = arith.constant dense<0.000000e+00> : vector<16xf32>
    %2 = vector.multi_reduction <add>, %1, %cst [1] : vector<16x128xf32> to vector<16xf32>
    %3 = vector.shape_cast %2 : vector<16xf32> to vector<16x1xf32>
    %cst_1 = arith.constant 1.280000e+02 : f32
    %4 = vector.broadcast %cst_1 : f32 to vector<16x1xf32>
    %5 = arith.divf %3, %4 : vector<16x1xf32>
    %cst_2 = arith.constant 9.99999997E-7 : f32
    %6 = vector.broadcast %cst_2 : f32 to vector<16x1xf32>
    %7 = arith.addf %5, %6 : vector<16x1xf32>
    %8 = math.rsqrt %7 : vector<16x1xf32>
    %9 = vector.broadcast %8 : vector<16x1xf32> to vector<16x128xf32>
    %10 = arith.mulf %0, %9 : vector<16x128xf32>
    %c0_3 = arith.constant 0 : index
    %c0_4 = arith.constant 0 : index
    %11 = vector.load %arg2[%c0_3, %c0_4] : memref<1x128xf32, #tpu.memory_space<vmem>>, vector<1x128xf32>
    %12 = vector.broadcast %11 : vector<1x128xf32> to vector<16x128xf32>
    %13 = arith.mulf %10, %12 : vector<16x128xf32>
    %c0_5 = arith.constant 0 : index
    %c0_6 = arith.constant 0 : index
    %14 = vector.load %arg3[%c0_5, %c0_6] : memref<16x128xf32, #tpu.memory_space<vmem>>, vector<16x128xf32>
    tpu.vector_store %arg3[%c0_5, %c0_6], %13 {strides = array<i32>} : memref<16x128xf32, #tpu.memory_space<vmem>>, vector<16x128xf32>,
    return
  }
  func.func @transform_0(%arg0: i32) -> (i32, i32) {
    %c0_i32 = arith.constant 0 : i32
    %c0_i32_0 = arith.constant 0 : i32
    return %arg0, %c0_i32 : i32, i32
  }
  func.func @transform_1(%arg0: i32) -> (i32, i32) {
    %c0_i32 = arith.constant 0 : i32
    %c0_i32_0 = arith.constant 0 : i32
    %c0_i32_1 = arith.constant 0 : i32
    return %c0_i32, %c0_i32_0 : i32, i32
  }
  func.func @transform_2(%arg0: i32) -> (i32, i32) {
    %c0_i32 = arith.constant 0 : i32
    %c0_i32_0 = arith.constant 0 : i32
    return %arg0, %c0_i32 : i32, i32
  }
}

</mosaic_0001>

<llo_original>
// kernel: tpu_custom_call.1
$region0: #{tpu_custom_call.1}
  #allocation0 [shape = 'u32[]', space=smem, size = 0x4, offset = 0x4, fixed_abs, tag = 'smem constant byte address 0x4 - core index']
  #allocation1 [shape = 'u32[144,128]{1,0:T(1,128)}', space=vmem, size = 0x12000, scoped, tag = 'internal scratch']
  %s0 = inlined_call_operand.hbm [shape: f32[16,128], index: 0, kind: input, shape index: {}]
  %s1 = inlined_call_operand.vmem [shape: f32[1,128], index: 1, kind: input, shape index: {}]
  %s2 = inlined_call_operand.hbm [shape: f32[16,128], index: 2, kind: output, shape index: {}]
  %s3 = sld [smem:[#allocation0]]
  $region22: #{tpu_custom_call.1} parent=0
    _
  %s5 = ssub.s32 1, %s3
  %s6 = scalar_select 0, %s5, %s3
  $region1: #{tpu_custom_call.1} parent=0
    #allocation2 [shape = 'u8[8192]{0}', space=vmem, size = 0x2000, scoped, tag = 'input window, operand 0, single buffered']
    #allocation3 [shape = 's32[1]{0}', space=sflag, size = 0x4, scoped, tag = 'scoped memory for tpu_custom_call.1']
    #allocation4 [shape = 's32[1]{0}', space=sflag, size = 0x4, scoped, tag = 'scoped memory for tpu_custom_call.1']
    #allocation5 [shape = 'u8[8192]{0}', space=vmem, size = 0x2000, scoped, tag = 'output window, operand 0, single buffered']
    %7 = vsyncpa [#allocation3], 0
    %8 = vsyncpa [#allocation4], 0
    // Predicated region
    $region2: #{tpu_custom_call.1} parent=1 // pred_check
      _
    $region3: #{tpu_custom_call.1} parent=1 // pred_check_branch
      %10 = sbr.rel (0) target = $region5
    $region4: #{tpu_custom_call.1} parent=1 // pred_region
      %s12 = ssub.s32 256, 256
      %13 = vsyncadd [#allocation3], %s12
      %s14 = sshll.u32 [#allocation2], 4
      %s15 = int_to_ptr.vmem [resolvable:$true] %s14
      %20 = dma.hbm_to_vmem [thread:$0]  %s0, 256, %s15, [#allocation3], 128, 128, 8
    $region5: #{tpu_custom_call.1} parent=1 // pred_fallthru
      _
    // Predicated region
    $region6: #{tpu_custom_call.1} parent=1 // pred_check
      _
    $region7: #{tpu_custom_call.1} parent=1 // pred_check_branch
      %22 = sbr.rel (0) target = $region9
    $region8: #{tpu_custom_call.1} parent=1 // pred_region
      _
    $region9: #{tpu_custom_call.1} parent=1 // pred_fallthru
      _
    // Predicated region
    $region10: #{tpu_custom_call.1} parent=1 // pred_check
      _
    $region11: #{tpu_custom_call.1} parent=1 // pred_check_branch
      %24 = sbr.rel (0) target = $region13
    $region12: #{tpu_custom_call.1} parent=1 // pred_region
      %25 = dma.done [#allocation3], 256
    $region13: #{tpu_custom_call.1} parent=1 // pred_fallthru
      _
    %v26 = vld [vmem:[#allocation2] sm:$0xff]
    %v27 = vld [vmem:[#allocation2 + $0x8] sm:$0xff]
    %v28 = vmul.f32 %v26, %v26
    %v29 = vmul.f32 %v27, %v27
    %30 = vadd.xlane.f32.xlu0 %v28
    %v31 = vpop.xlane.xlu0 %30
    %32 = vadd.xlane.f32.xlu0 %v29
    %v33 = vpop.xlane.xlu0 %32
    %v34 = vrcp.pop 128.0
    %v35 = vmul.f32 %v31, %v34
    %v36 = vmul.f32 %v33, %v34
    %v37 = vadd.f32 %v35, 1e-06
    %v38 = vadd.f32 %v36, 1e-06
    %v39 = vrsqrt.pop %v37
    %v40 = vrsqrt.pop %v38
    %v41 = vmul.f32 %v26, %v39
    %v42 = vmul.f32 %v27, %v40
    %v43 = vld [vmem:[%s1] sm:$0x1]
    %v45 = vlaneseq
    %v46 = vshrl.u32 %v45, 7
    %v47 = vsub.s32 0, %v46
    %v48 = vrot.slane %v43, %v47
    %v50 = vmul.f32 %v41, %v48
    %v51 = vmul.f32 %v42, %v48
    %52 = vst [vmem:[#allocation5] sm:$0xff] %v50
    %53 = vst [vmem:[#allocation5 + $0x8] sm:$0xff] %v51
    // Predicated region
    $region14: #{tpu_custom_call.1} parent=1 // pred_check
      _
    $region15: #{tpu_custom_call.1} parent=1 // pred_check_branch
      %55 = sbr.rel (0) target = $region17
    $region16: #{tpu_custom_call.1} parent=1 // pred_region
      %s57 = ssub.s32 256, 256
      %58 = vsyncadd [#allocation4], %s57
      %s59 = sshll.u32 [#allocation5], 4
      %s60 = int_to_ptr.vmem [resolvable:$true] %s59
      %65 = dma.vmem_to_hbm [thread:$0]  %s60, 256, %s2, [#allocation4], 128, 128, 8
    $region17: #{tpu_custom_call.1} parent=1 // pred_fallthru
      _
    // Predicated region
    $region18: #{tpu_custom_call.1} parent=1 // pred_check
      _
    $region19: #{tpu_custom_call.1} parent=1 // pred_check_branch
      %67 = sbr.rel (0) target = $region21
    $region20: #{tpu_custom_call.1} parent=1 // pred_region
      %68 = dma.done [#allocation4], 256
    $region21: #{tpu_custom_call.1} parent=1 // pred_fallthru
      _
    %69 = vsyncpa [#allocation3], 1
    %70 = vsyncpa [#allocation4], 1

</llo_original>
